<compile_context>
chip_gen: v7x
topology: tpu7x:2x2x1
jax: 0.10.0
libtpu: 0.0.40
codegen_flags: <defaults>
</compile_context>

<pallas_src>
import jax
import jax.numpy as jnp
from jax import lax
from jax.experimental import pallas as pl
from jax.experimental.pallas import tpu as pltpu

_LANE = 128      # lane width (last dim of every block)
_SUB = 8         # f32 sublanes per vreg (accumulator rows)
_TR_MAX = 1024   # max block rows: (1024, 128) f32 = 512 KiB per input block


def _round_up(x, m):
    return -(-x // m) * m


def _num_tensorcores():
    """Grid 'parallel' split: 2 on dual-TensorCore (v7x) chips, 1 on v5e/v6e."""
    try:
        dev = jax.devices()[0]
        if dev.platform != "tpu":
            return 1
        kind = str(getattr(dev, "device_kind", "")).lower()
        if "v7" in kind or "7x" in kind:
            return 2
        ncores = getattr(dev, "num_cores", None)
        if isinstance(ncores, int) and ncores > 0:
            return min(2, ncores)
    except Exception:   # defensive: 1 is always correct (just less parallel)
        pass
    return 1


def _shift_from_above(x, m):
    """y[l] = x[(l + m) % 128] along the lane axis (one XLU rotate)."""
    return pltpu.roll(x, (_LANE - m) % _LANE, axis=1)


def _shift_from_below(x, m):
    """y[l] = x[(l - m) % 128] along the lane axis (one XLU rotate)."""
    return pltpu.roll(x, m % _LANE, axis=1)


def _qme_kernel(pred_ref, true_ref, out_ref, acc_ref):
    step = pl.program_id(1)

    @pl.when(step == 0)
    def _init():
        acc_ref[...] = jnp.zeros_like(acc_ref)

    # Interleaved layout: lane l of a row holds component (l % 4) of quaternion
    # (row*32 + l//4).  Promote to f32 in-kernel (inputs may be bf16).
    p = pred_ref[...].astype(jnp.float32)          # (tr, 128)
    t = true_ref[...].astype(jnp.float32)          # (tr, 128)
    tr = p.shape[0]

    lane = lax.broadcasted_iota(jnp.int32, (tr, _LANE), 1)
    even = (lane & 1) == 0                         # component index in {0, 2}
    low2 = (lane & 2) == 0                         # component index in {0, 1}

    # XOR-within-group-of-4 lane shuffles of `true`: t_xorM[l] = t[l ^ M].
    # Quaternion groups of 4 lanes never straddle the 128-lane row, so the
    # circular wrap of the rotate is never selected.
    t_xor1 = jnp.where(even, _shift_from_above(t, 1), _shift_from_below(t, 1))
    t_xor2 = jnp.where(low2, _shift_from_above(t, 2), _shift_from_below(t, 2))
    t_xor3 = jnp.where(low2, _shift_from_above(t_xor1, 2),
                       _shift_from_below(t_xor1, 2))

    # Hamilton product pred * conj(true), conj folded into per-lane signs:
    #   q2: signs [-1,+1,-1,+1] over components, partner index k^1
    #   q3: signs [-1,+1,+1,-1] over components, partner index k^2
    #   q4: signs [-1,-1,+1,+1] over components, partner index k^3
    one = jnp.float32(1.0)
    s2 = jnp.where(even, -one, one)
    s3 = jnp.where(jnp.logical_xor(even, low2), one, -one)
    s4 = jnp.where(low2, -one, one)

    e2 = p * s2 * t_xor1
    e3 = p * s3 * t_xor2
    e4 = p * s4 * t_xor3

    def group4_sum(e):
        # After two shifted adds, lanes with l % 4 == 0 hold the sum over the
        # 4 lanes of their quaternion group (other lanes hold don't-cares).
        e = e + _shift_from_above(e, 1)
        return e + _shift_from_above(e, 2)

    q2 = group4_sum(e2)
    q3 = group4_sum(e3)
    q4 = group4_sum(e4)

    per = jnp.abs(q2) + jnp.abs(q3) + jnp.abs(q4)      # valid where l % 4 == 0
    per = jnp.where((lane & 3) == 0, per, 0.0)         # one value per quaternion

    # Fold sublane groups into the (8, 128) accumulator with pure VPU adds.
    acc_ref[...] += jnp.sum(per.reshape(tr // _SUB, _SUB, _LANE), axis=0)

    @pl.when(step == pl.num_programs(1) - 1)
    def _finalize():
        # Lane-dense, unmasked store of this core's partial-sum plane.
        out_ref[...] = acc_ref[...].reshape(1, _SUB, _LANE)


def quaternion_multiplicative_error(pred, true, *, rows_per_tile=_TR_MAX,
                                    num_cores=None):
    """pred, true: (B, 4) quaternions. Returns scalar float32 mean QME."""
    pred = jnp.asarray(pred)
    true = jnp.asarray(true)
    assert pred.shape == true.shape and pred.ndim == 2 and pred.shape[1] == 4
    batch = pred.shape[0]

    def _canon(x):
        # Keep f32 / bf16 as-is (bf16 is DMA'd at half the bytes and promoted
        # in-kernel); anything else is promoted to f32 up front.
        return x if x.dtype in (jnp.float32, jnp.bfloat16) else x.astype(jnp.float32)

    pred = _canon(pred)
    true = _canon(true)

    nc = _num_tensorcores() if num_cores is None else max(1, int(num_cores))

    # Block-row alignment: 8 sublanes for 4-byte dtypes, 16 for 16-bit dtypes.
    align = max(_SUB, 32 // pred.dtype.itemsize, 32 // true.dtype.itemsize)

    n_elems = 4 * batch
    rows_min = pl.cdiv(n_elems, _LANE)
    rows_per_core = pl.cdiv(rows_min, nc)
    tr = _round_up(min(rows_per_tile, _round_up(rows_per_core, align)), align)
    steps = pl.cdiv(rows_per_core, tr)
    rows = nc * steps * tr               # exact tiling: no OOB blocks anywhere
    n_pad = rows * _LANE

    def _prep(x):
        flat = x.reshape(-1)             # free bitcast of contiguous (B, 4)
        if n_pad != n_elems:
            # TODO(synk): one fused O(B) zero-pad copy remains when 4*B doesn't
            # tile exactly; zero quaternions contribute exactly 0 to the sum.
            flat = jnp.pad(flat, (0, n_pad - n_elems))
        return flat.reshape(rows, _LANE)  # free bitcast

    pred_t = _prep(pred)
    true_t = _prep(true)

    in_spec = pl.BlockSpec((tr, _LANE), lambda c, i: (c * steps + i, 0))
    bytes_accessed = (pred_t.size * pred_t.dtype.itemsize
                      + true_t.size * true_t.dtype.itemsize
                      + nc * _SUB * _LANE * 4)

    partials = pl.pallas_call(
        _qme_kernel,
        out_shape=jax.ShapeDtypeStruct((nc, _SUB, _LANE), jnp.float32),
        grid=(nc, steps),
        in_specs=[in_spec, in_spec],
        out_specs=pl.BlockSpec((1, _SUB, _LANE), lambda c, i: (c, 0, 0)),
        scratch_shapes=[pltpu.VMEM((_SUB, _LANE), jnp.float32)],
        compiler_params=pltpu.CompilerParams(
            dimension_semantics=("parallel", "arbitrary"),
            vmem_limit_bytes=32 * 1024 * 1024),
        cost_estimate=pl.CostEstimate(
            flops=20 * n_pad, transcendentals=0, bytes_accessed=bytes_accessed),
    )(pred_t, true_t)

    # Tiny final combine (nc * 8 * 128 values) + mean scale.
    return (2.0 / batch) * jnp.sum(partials)


def _reference(pred, true):
    # Pure-JAX reference mirroring the PyTorch loop.
    pred = jnp.asarray(pred, jnp.float32)
    true = jnp.asarray(true, jnp.float32)
    conj = jnp.array([1.0, -1.0, -1.0, -1.0], jnp.float32)
    t = true * conj
    a1, b1, c1, d1 = (pred[:, i] for i in range(4))
    a2, b2, c2, d2 = (t[:, i] for i in range(4))
    q2 = a1 * b2 + b1 * a2 + c1 * d2 - d1 * c2
    q3 = a1 * c2 - b1 * d2 + c1 * a2 + d1 * b2
    q4 = a1 * d2 + b1 * c2 - c1 * b2 + d1 * a2
    return jnp.mean(2.0 * (jnp.abs(q2) + jnp.abs(q3) + jnp.abs(q4)))


if __name__ == "__main__":
    key = jax.random.PRNGKey(0)
    k1, k2 = jax.random.split(key)

    # Small, module-consistent shapes: a batch of unit quaternions (B, 4).
    B = 8
    pred = jax.random.normal(k1, (B, 4), jnp.float32)
    true = jax.random.normal(k2, (B, 4), jnp.float32)
    pred = pred / jnp.linalg.norm(pred, axis=1, keepdims=True)
    true = true / jnp.linalg.norm(true, axis=1, keepdims=True)

    out = jax.block_until_ready(quaternion_multiplicative_error(pred, true))
    ref = _reference(pred, true)
    assert jnp.allclose(out, ref, rtol=1e-5, atol=1e-5), (out, ref)

    # Also exercise an unaligned batch (tail zero-pad) and a multi-step grid.
    B2 = 300
    p2 = jax.random.normal(k1, (B2, 4), jnp.float32)
    t2 = jax.random.normal(k2, (B2, 4), jnp.float32)
    out2 = jax.block_until_ready(
        quaternion_multiplicative_error(p2, t2, rows_per_tile=8))
    ref2 = _reference(p2, t2)
    assert jnp.allclose(out2, ref2, rtol=1e-5, atol=1e-5), (out2, ref2)

    print("KERNEL_OK")
</pallas_src>

<mosaic_0001>
module attributes {stable_mosaic.version = 11 : i64} {
  func.func @_qme_kernel(%arg0: i32, %arg1: i32, %arg2: memref<8x128xf32, #tpu.memory_space<vmem>>, %arg3: memref<8x128xf32, #tpu.memory_space<vmem>>, %arg4: memref<1x8x128xf32, #tpu.memory_space<vmem>>, %arg5: memref<8x128xf32, #tpu.memory_space<vmem>>) attributes {dimension_semantics = [#tpu.dimension_semantics<parallel>, #tpu.dimension_semantics<arbitrary>], iteration_bounds = array<i64: 1, 1>, scalar_prefetch = 0 : i64, scratch_operands = 1 : i64, tpu.core_type = #tpu.core_type<tc>, window_params = [{transform_indices = @transform_0, window_bounds = array<i64: 8, 128>}, {transform_indices = @transform_1, window_bounds = array<i64: 8, 128>}, {transform_indices = @transform_2, window_bounds = array<i64: 1, 8, 128>}]} {
    %c0_i32 = arith.constant 0 : i32
    %0 = arith.cmpi eq, %arg1, %c0_i32 : i32
    %1 = arith.extui %0 : i1 to i32
    %c0_i32_0 = arith.constant 0 : i32
    %2 = arith.cmpi ne, %1, %c0_i32_0 : i32
    scf.if %2 {
      %cst_33 = arith.constant 0.000000e+00 : f32
      %73 = vector.broadcast %cst_33 : f32 to vector<8x128xf32>
      %c0_34 = arith.constant 0 : index
      %c0_35 = arith.constant 0 : index
      %74 = vector.load %arg5[%c0_34, %c0_35] : memref<8x128xf32, #tpu.memory_space<vmem>>, vector<8x128xf32>
      tpu.vector_store %arg5[%c0_34, %c0_35], %73 {strides = array<i32>} : memref<8x128xf32, #tpu.memory_space<vmem>>, vector<8x128xf32>,
    } else {
    }
    %c0 = arith.constant 0 : index
    %c0_1 = arith.constant 0 : index
    %3 = vector.load %arg2[%c0, %c0_1] : memref<8x128xf32, #tpu.memory_space<vmem>>, vector<8x128xf32>
    %c0_2 = arith.constant 0 : index
    %c0_3 = arith.constant 0 : index
    %4 = vector.load %arg3[%c0_2, %c0_3] : memref<8x128xf32, #tpu.memory_space<vmem>>, vector<8x128xf32>
    %5 = tpu.iota {dimensions = array<i32: 1>} : vector<8x128xi32>
    %c1_i32 = arith.constant 1 : i32
    %6 = vector.broadcast %c1_i32 : i32 to vector<8x128xi32>
    %7 = arith.andi %5, %6 : vector<8x128xi32>
    %c0_i32_4 = arith.constant 0 : i32
    %8 = vector.broadcast %c0_i32_4 : i32 to vector<8x128xi32>
    %9 = arith.cmpi eq, %7, %8 : vector<8x128xi32>
    %c2_i32 = arith.constant 2 : i32
    %10 = vector.broadcast %c2_i32 : i32 to vector<8x128xi32>
    %11 = arith.andi %5, %10 : vector<8x128xi32>
    %c0_i32_5 = arith.constant 0 : i32
    %12 = vector.broadcast %c0_i32_5 : i32 to vector<8x128xi32>
    %13 = arith.cmpi eq, %11, %12 : vector<8x128xi32>
    %c127_i32 = arith.constant 127 : i32
    %14 = tpu.dynamic_rotate %4 by %c127_i32 dim 1 : vector<8x128xf32>, i32 -> vector<8x128xf32>
    %c1_i32_6 = arith.constant 1 : i32
    %15 = tpu.dynamic_rotate %4 by %c1_i32_6 dim 1 : vector<8x128xf32>, i32 -> vector<8x128xf32>
    %16 = arith.select %9, %14, %15 : vector<8x128xi1>, vector<8x128xf32>
    %c126_i32 = arith.constant 126 : i32
    %17 = tpu.dynamic_rotate %4 by %c126_i32 dim 1 : vector<8x128xf32>, i32 -> vector<8x128xf32>
    %c2_i32_7 = arith.constant 2 : i32
    %18 = tpu.dynamic_rotate %4 by %c2_i32_7 dim 1 : vector<8x128xf32>, i32 -> vector<8x128xf32>
    %19 = arith.select %13, %17, %18 : vector<8x128xi1>, vector<8x128xf32>
    %c126_i32_8 = arith.constant 126 : i32
    %20 = tpu.dynamic_rotate %16 by %c126_i32_8 dim 1 : vector<8x128xf32>, i32 -> vector<8x128xf32>
    %c2_i32_9 = arith.constant 2 : i32
    %21 = tpu.dynamic_rotate %16 by %c2_i32_9 dim 1 : vector<8x128xf32>, i32 -> vector<8x128xf32>
    %22 = arith.select %13, %20, %21 : vector<8x128xi1>, vector<8x128xf32>
    %cst = arith.constant 0.000000e+00 : f32
    %cst_10 = arith.constant 1.000000e+00 : f32
    %23 = arith.subf %cst, %cst_10 : f32
    %cst_11 = arith.constant 1.000000e+00 : f32
    %24 = vector.broadcast %23 : f32 to vector<8x128xf32>
    %25 = vector.broadcast %cst_11 : f32 to vector<8x128xf32>
    %26 = arith.select %9, %24, %25 : vector<8x128xi1>, vector<8x128xf32>
    %27 = arith.xori %9, %13 : vector<8x128xi1>
    %cst_12 = arith.constant 0.000000e+00 : f32
    %cst_13 = arith.constant 1.000000e+00 : f32
    %28 = arith.subf %cst_12, %cst_13 : f32
    %cst_14 = arith.constant 1.000000e+00 : f32
    %29 = vector.broadcast %cst_14 : f32 to vector<8x128xf32>
    %30 = vector.broadcast %28 : f32 to vector<8x128xf32>
    %31 = arith.select %27, %29, %30 : vector<8x128xi1>, vector<8x128xf32>
    %cst_15 = arith.constant 0.000000e+00 : f32
    %cst_16 = arith.constant 1.000000e+00 : f32
    %32 = arith.subf %cst_15, %cst_16 : f32
    %cst_17 = arith.constant 1.000000e+00 : f32
    %33 = vector.broadcast %32 : f32 to vector<8x128xf32>
    %34 = vector.broadcast %cst_17 : f32 to vector<8x128xf32>
    %35 = arith.select %13, %33, %34 : vector<8x128xi1>, vector<8x128xf32>
    %36 = arith.mulf %3, %26 : vector<8x128xf32>
    %37 = arith.mulf %36, %16 : vector<8x128xf32>
    %38 = arith.mulf %3, %31 : vector<8x128xf32>
    %39 = arith.mulf %38, %19 : vector<8x128xf32>
    %40 = arith.mulf %3, %35 : vector<8x128xf32>
    %41 = arith.mulf %40, %22 : vector<8x128xf32>
    %c127_i32_18 = arith.constant 127 : i32
    %42 = tpu.dynamic_rotate %37 by %c127_i32_18 dim 1 : vector<8x128xf32>, i32 -> vector<8x128xf32>
    %43 = arith.addf %37, %42 : vector<8x128xf32>
    %c126_i32_19 = arith.constant 126 : i32
    %44 = tpu.dynamic_rotate %43 by %c126_i32_19 dim 1 : vector<8x128xf32>, i32 -> vector<8x128xf32>
    %45 = arith.addf %43, %44 : vector<8x128xf32>
    %c127_i32_20 = arith.constant 127 : i32
    %46 = tpu.dynamic_rotate %39 by %c127_i32_20 dim 1 : vector<8x128xf32>, i32 -> vector<8x128xf32>
    %47 = arith.addf %39, %46 : vector<8x128xf32>
    %c126_i32_21 = arith.constant 126 : i32
    %48 = tpu.dynamic_rotate %47 by %c126_i32_21 dim 1 : vector<8x128xf32>, i32 -> vector<8x128xf32>
    %49 = arith.addf %47, %48 : vector<8x128xf32>
    %c127_i32_22 = arith.constant 127 : i32
    %50 = tpu.dynamic_rotate %41 by %c127_i32_22 dim 1 : vector<8x128xf32>, i32 -> vector<8x128xf32>
    %51 = arith.addf %41, %50 : vector<8x128xf32>
    %c126_i32_23 = arith.constant 126 : i32
    %52 = tpu.dynamic_rotate %51 by %c126_i32_23 dim 1 : vector<8x128xf32>, i32 -> vector<8x128xf32>
    %53 = arith.addf %51, %52 : vector<8x128xf32>
    %54 = math.absf %45 : vector<8x128xf32>
    %55 = math.absf %49 : vector<8x128xf32>
    %56 = arith.addf %54, %55 : vector<8x128xf32>
    %57 = math.absf %53 : vector<8x128xf32>
    %58 = arith.addf %56, %57 : vector<8x128xf32>
    %c3_i32 = arith.constant 3 : i32
    %59 = vector.broadcast %c3_i32 : i32 to vector<8x128xi32>
    %60 = arith.andi %5, %59 : vector<8x128xi32>
    %c0_i32_24 = arith.constant 0 : i32
    %61 = vector.broadcast %c0_i32_24 : i32 to vector<8x128xi32>
    %62 = arith.cmpi eq, %60, %61 : vector<8x128xi32>
    %cst_25 = arith.constant 0.000000e+00 : f32
    %63 = vector.broadcast %cst_25 : f32 to vector<8x128xf32>
    %64 = arith.select %62, %58, %63 : vector<8x128xi1>, vector<8x128xf32>
    %c0_26 = arith.constant 0 : index
    %c0_27 = arith.constant 0 : index
    %65 = vector.load %arg5[%c0_26, %c0_27] : memref<8x128xf32, #tpu.memory_space<vmem>>, vector<8x128xf32>
    %66 = vector.shape_cast %64 : vector<8x128xf32> to vector<1x8x128xf32>
    %cst_28 = arith.constant dense<0.000000e+00> : vector<8x128xf32>
    %67 = vector.multi_reduction <add>, %66, %cst_28 [0] : vector<1x8x128xf32> to vector<8x128xf32>
    %68 = arith.addf %65, %67 : vector<8x128xf32>
    %c0_29 = arith.constant 0 : index
    %c0_30 = arith.constant 0 : index
    %69 = vector.load %arg5[%c0_29, %c0_30] : memref<8x128xf32, #tpu.memory_space<vmem>>, vector<8x128xf32>
    tpu.vector_store %arg5[%c0_29, %c0_30], %68 {strides = array<i32>} : memref<8x128xf32, #tpu.memory_space<vmem>>, vector<8x128xf32>,
    %c0_i32_31 = arith.constant 0 : i32
    %70 = arith.cmpi eq, %arg1, %c0_i32_31 : i32
    %71 = arith.extui %70 : i1 to i32
    %c0_i32_32 = arith.constant 0 : i32
    %72 = arith.cmpi ne, %71, %c0_i32_32 : i32
    scf.if %72 {
      %c0_33 = arith.constant 0 : index
      %c0_34 = arith.constant 0 : index
      %73 = vector.load %arg5[%c0_33, %c0_34] : memref<8x128xf32, #tpu.memory_space<vmem>>, vector<8x128xf32>
      %74 = vector.shape_cast %73 : vector<8x128xf32> to vector<1x8x128xf32>
      %c0_35 = arith.constant 0 : index
      %c0_36 = arith.constant 0 : index
      %c0_37 = arith.constant 0 : index
      %75 = vector.load %arg4[%c0_35, %c0_36, %c0_37] : memref<1x8x128xf32, #tpu.memory_space<vmem>>, vector<1x8x128xf32>
      tpu.vector_store %arg4[%c0_35, %c0_36, %c0_37], %74 {strides = array<i32>} : memref<1x8x128xf32, #tpu.memory_space<vmem>>, vector<1x8x128xf32>,
    } else {
    }
    return
  }
  func.func @transform_0(%arg0: i32, %arg1: i32) -> (i32, i32) {
    %c1_i32 = arith.constant 1 : i32
    %0 = arith.muli %arg0, %c1_i32 : i32
    %1 = arith.addi %0, %arg1 : i32
    %c0_i32 = arith.constant 0 : i32
    %c0_i32_0 = arith.constant 0 : i32
    return %1, %c0_i32 : i32, i32
  }
  func.func @transform_1(%arg0: i32, %arg1: i32) -> (i32, i32) {
    %c1_i32 = arith.constant 1 : i32
    %0 = arith.muli %arg0, %c1_i32 : i32
    %1 = arith.addi %0, %arg1 : i32
    %c0_i32 = arith.constant 0 : i32
    %c0_i32_0 = arith.constant 0 : i32
    return %1, %c0_i32 : i32, i32
  }
  func.func @transform_2(%arg0: i32, %arg1: i32) -> (i32, i32, i32) {
    %c0_i32 = arith.constant 0 : i32
    %c0_i32_0 = arith.constant 0 : i32
    %c0_i32_1 = arith.constant 0 : i32
    return %arg0, %c0_i32, %c0_i32_0 : i32, i32, i32
  }
}

</mosaic_0001>

<llo_original>
// kernel: tpu_custom_call.1
$region0: #{tpu_custom_call.1}
  #allocation0 [shape = 'u32[]', space=smem, size = 0x4, offset = 0x4, fixed_abs, tag = 'smem constant byte address 0x4 - core index']
  #allocation1 [shape = 'u32[144,128]{1,0:T(1,128)}', space=vmem, size = 0x12000, scoped, tag = 'internal scratch']
  #allocation2 [shape = 'f32[8,128]{1,0:T(8,128)}', space=vmem, size = 0x1000, scoped, tag = 'scratch operand']
  %s0 = inlined_call_operand.hbm [shape: f32[8,128], index: 0, kind: input, shape index: {}]
  %s1 = inlined_call_operand.hbm [shape: f32[8,128], index: 1, kind: input, shape index: {}]
  %s2 = inlined_call_operand.hbm [shape: f32[1,8,128], index: 2, kind: output, shape index: {}]
  %s3 = sld [smem:[#allocation0]]
  $region34: #{tpu_custom_call.1} parent=0
    _
  %s5 = ssub.s32 1, %s3
  %s6 = scalar_select 0, %s5, %s3
  $region1: #{tpu_custom_call.1} parent=0
    #allocation3 [shape = 'u8[4096]{0}', space=vmem, size = 0x1000, scoped, tag = 'input window, operand 0, single buffered']
    #allocation4 [shape = 's32[1]{0}', space=sflag, size = 0x4, scoped, tag = 'scoped memory for tpu_custom_call.1']
    #allocation5 [shape = 's32[1]{0}', space=sflag, size = 0x4, scoped, tag = 'scoped memory for tpu_custom_call.1']
    #allocation6 [shape = 'u8[4096]{0}', space=vmem, size = 0x1000, scoped, tag = 'input window, operand 1, single buffered']
    #allocation7 [shape = 's32[1]{0}', space=sflag, size = 0x4, scoped, tag = 'scoped memory for tpu_custom_call.1']
    #allocation8 [shape = 'u8[4096]{0}', space=vmem, size = 0x1000, scoped, tag = 'output window, operand 0, single buffered']
    %7 = vsyncpa [#allocation4], 0
    %8 = vsyncpa [#allocation7], 0
    %9 = vsyncpa [#allocation5], 0
    // Predicated region
    $region2: #{tpu_custom_call.1} parent=1 // pred_check
      _
    $region3: #{tpu_custom_call.1} parent=1 // pred_check_branch
      %11 = sbr.rel (0) target = $region5
    $region4: #{tpu_custom_call.1} parent=1 // pred_region
      %s12 = sadd.s32 0, 0
      %s14 = ssub.s32 128, 128
      %15 = vsyncadd [#allocation4], %s14
      %s16 = smul.addr %s12, 128
      %s17 = scalar_lea.hbm %s0, %s16
      %s19 = sshll.u32 [#allocation3], 4
      %s20 = int_to_ptr.vmem [resolvable:$true] %s19
      %22 = dma.hbm_to_vmem [thread:$0]  %s17, 128, %s20, [#allocation4]
    $region5: #{tpu_custom_call.1} parent=1 // pred_fallthru
      _
    // Predicated region
    $region6: #{tpu_custom_call.1} parent=1 // pred_check
      _
    $region7: #{tpu_custom_call.1} parent=1 // pred_check_branch
      %24 = sbr.rel (0) target = $region9
    $region8: #{tpu_custom_call.1} parent=1 // pred_region
      %s25 = sadd.s32 0, 0
      %s27 = ssub.s32 128, 128
      %28 = vsyncadd [#allocation7], %s27
      %s29 = smul.addr %s25, 128
      %s30 = scalar_lea.hbm %s1, %s29
      %s32 = sshll.u32 [#allocation6], 4
      %s33 = int_to_ptr.vmem [resolvable:$true] %s32
      %35 = dma.hbm_to_vmem [thread:$0]  %s30, 128, %s33, [#allocation7]
    $region9: #{tpu_custom_call.1} parent=1 // pred_fallthru
      _
    // Predicated region
    $region10: #{tpu_custom_call.1} parent=1 // pred_check
      _
    $region11: #{tpu_custom_call.1} parent=1 // pred_check_branch
      %37 = sbr.rel (0) target = $region13
    $region12: #{tpu_custom_call.1} parent=1 // pred_region
      %38 = dma.done [#allocation4], 128
    $region13: #{tpu_custom_call.1} parent=1 // pred_fallthru
      _
    // Predicated region
    $region14: #{tpu_custom_call.1} parent=1 // pred_check
      _
    $region15: #{tpu_custom_call.1} parent=1 // pred_check_branch
      %40 = sbr.rel (0) target = $region17
    $region16: #{tpu_custom_call.1} parent=1 // pred_region
      %41 = dma.done [#allocation7], 128
    $region17: #{tpu_custom_call.1} parent=1 // pred_fallthru
      _
    %s42 = sadd.s32 0, 0
    %s43 = sadd.s32 0, 0
    %p44 = scmp.eq.s32.totalorder 0, 0
    // Predicated region
    $region18: #{tpu_custom_call.1} parent=1 // pred_check
      %p45 = pneg %p44
    $region19: #{tpu_custom_call.1} parent=1 // pred_check_branch
      %47 = sbr.rel (%p45) target = $region21
    $region20: #{tpu_custom_call.1} parent=1 // pred_region
      %48 = vst [vmem:[#allocation2] sm:$0xff] 0.0
    $region21: #{tpu_custom_call.1} parent=1 // pred_fallthru
      _
    %v49 = vld [vmem:[#allocation3] sm:$0xff]
    %v50 = vld [vmem:[#allocation6] sm:$0xff]
    %v51 = vlaneseq
    %v52 = vand.u32 %v51, 127
    %v53 = vand.u32 %v52, 1
    %vm54 = vcmp.eq.s32.totalorder %v53, 0
    %v55 = vand.u32 %v52, 2
    %vm56 = vcmp.eq.s32.totalorder %v55, 0
    %57 = vrot.lane.b32.xlu0 %v50, 127
    %v58 = vpop.permute.xlu0 %57
    %59 = vrot.lane.b32.xlu0 %v50, 1
    %v60 = vpop.permute.xlu0 %59
    %v61 = vsel %vm54, %v58, %v60
    %62 = vrot.lane.b32.xlu0 %v50, 126
    %v63 = vpop.permute.xlu0 %62
    %64 = vrot.lane.b32.xlu0 %v50, 2
    %v65 = vpop.permute.xlu0 %64
    %v66 = vsel %vm56, %v63, %v65
    %67 = vrot.lane.b32.xlu0 %v61, 126
    %v68 = vpop.permute.xlu0 %67
    %69 = vrot.lane.b32.xlu0 %v61, 2
    %v70 = vpop.permute.xlu0 %69
    %v71 = vsel %vm56, %v68, %v70
    %v72 = vsel %vm54, -1.0, 1.0
    %vm73 = vmxor %vm54, %vm56
    %v74 = vsel %vm73, 1.0, -1.0
    %v75 = vsel %vm56, -1.0, 1.0
    %v76 = vmul.f32 %v49, %v72
    %v77 = vmul.f32 %v76, %v61
    %v78 = vmul.f32 %v49, %v74
    %v79 = vmul.f32 %v78, %v66
    %v80 = vmul.f32 %v49, %v75
    %v81 = vmul.f32 %v80, %v71
    %82 = vrot.lane.b32.xlu0 %v77, 127
    %v83 = vpop.permute.xlu0 %82
    %v84 = vadd.f32 %v77, %v83
    %85 = vrot.lane.b32.xlu0 %v84, 126
    %v86 = vpop.permute.xlu0 %85
    %v87 = vadd.f32 %v84, %v86
    %88 = vrot.lane.b32.xlu0 %v79, 127
    %v89 = vpop.permute.xlu0 %88
    %v90 = vadd.f32 %v79, %v89
    %91 = vrot.lane.b32.xlu0 %v90, 126
    %v92 = vpop.permute.xlu0 %91
    %v93 = vadd.f32 %v90, %v92
    %94 = vrot.lane.b32.xlu0 %v81, 127
    %v95 = vpop.permute.xlu0 %94
    %v96 = vadd.f32 %v81, %v95
    %97 = vrot.lane.b32.xlu0 %v96, 126
    %v98 = vpop.permute.xlu0 %97
    %v99 = vadd.f32 %v96, %v98
    %v100 = vand.u32 2147483647, %v87
    %v101 = vand.u32 2147483647, %v93
    %v102 = vadd.f32 %v100, %v101
    %v103 = vand.u32 2147483647, %v99
    %v104 = vadd.f32 %v102, %v103
    %v105 = vand.u32 %v52, 3
    %vm106 = vcmp.eq.s32.totalorder %v105, 0
    %v107 = vsel %vm106, %v104, 0.0
    %v108 = vld [vmem:[#allocation2] sm:$0xff]
    %v109 = vadd.f32 %v107, 0.0
    %v110 = vadd.f32 %v108, %v109
    %111 = vst [vmem:[#allocation2] sm:$0xff] %v110
    // Predicated region
    $region22: #{tpu_custom_call.1} parent=1 // pred_check
      %p112 = pneg %p44
    $region23: #{tpu_custom_call.1} parent=1 // pred_check_branch
      %114 = sbr.rel (%p112) target = $region25
    $region24: #{tpu_custom_call.1} parent=1 // pred_region
      %v115 = vld [vmem:[#allocation2] sm:$0xff]
      %116 = vst [vmem:[#allocation8] sm:$0xff] %v115
    $region25: #{tpu_custom_call.1} parent=1 // pred_fallthru
      _
    // Predicated region
    $region26: #{tpu_custom_call.1} parent=1 // pred_check
      _
    $region27: #{tpu_custom_call.1} parent=1 // pred_check_branch
      %118 = sbr.rel (0) target = $region29
    $region28: #{tpu_custom_call.1} parent=1 // pred_region
      %s120 = ssub.s32 128, 128
      %121 = vsyncadd [#allocation5], %s120
      %s123 = sshll.u32 [#allocation8], 4
      %s124 = int_to_ptr.vmem [resolvable:$true] %s123
      %126 = dma.vmem_to_hbm [thread:$0]  %s124, 128, %s2, [#allocation5]
    $region29: #{tpu_custom_call.1} parent=1 // pred_fallthru
      _
    // Predicated region
    $region30: #{tpu_custom_call.1} parent=1 // pred_check
      _
    $region31: #{tpu_custom_call.1} parent=1 // pred_check_branch
      %128 = sbr.rel (0) target = $region33
    $region32: #{tpu_custom_call.1} parent=1 // pred_region
      %129 = dma.done [#allocation5], 128
    $region33: #{tpu_custom_call.1} parent=1 // pred_fallthru
      _
    %130 = vsyncpa [#allocation4], 1
    %131 = vsyncpa [#allocation7], 1
    %132 = vsyncpa [#allocation5], 1

</llo_original>
